<compile_context>
chip_gen: v7x
topology: tpu7x:2x2x1
jax: 0.10.0
libtpu: 0.0.40
codegen_flags: <defaults>
</compile_context>

<pallas_src>
import functools

import jax
import jax.numpy as jnp
from jax.experimental import pallas as pl
from jax.experimental.pallas import tpu as pltpu

HIDDEN = 128  # probe hidden width == TPU lane width

# VMEM byte budget for the double-buffered x/out pipeline tiles.  16 MiB keeps
# tiles + (double-buffered) weights + compiler scratch under the 32 MiB scoped limit
# requested below on every generation.
# NOTE: for very large in_dim (>~8K f32) a K-tiled variant (inner "arbitrary" grid axis
# over in_dim with an f32 h1 accumulator) would be needed to keep a healthy block_batch;
# not implemented here since the probe's typical in_dim is modest.
_TILE_VMEM_BUDGET = 16 * 2**20
_MAX_BLOCK_BATCH = 1024  # fewer grid steps (~0.35 us each); 1024 is near the DMA sweet spot


def _round_up(n, m):
    return ((n + m - 1) // m) * m


def _mlp_probe_kernel(x_ref, w1_ref, b1_ref, w2_ref, b2_ref, w3_ref, b3_ref, o_ref):
    # Three MXU matmuls + bias + ReLU fused.  Activations are cast to the weight dtype
    # before each dot (bf16 weights => bf16 MXU inputs on any generation); accumulation,
    # bias add and ReLU stay f32.
    x = x_ref[...]
    h = jnp.dot(x.astype(w1_ref.dtype), w1_ref[...],
                preferred_element_type=jnp.float32) + b1_ref[...]
    h = jnp.maximum(h, 0.0)
    h = jnp.dot(h.astype(w2_ref.dtype), w2_ref[...],
                preferred_element_type=jnp.float32) + b2_ref[...]
    h = jnp.maximum(h, 0.0)
    out = jnp.dot(h.astype(w3_ref.dtype), w3_ref[...],
                  preferred_element_type=jnp.float32) + b3_ref[...]
    o_ref[...] = out.astype(o_ref.dtype)


def _pick_block_batch(batch, in_dim, out_dim, x_itemsize, out_itemsize):
    if batch <= 8:
        return batch  # single tile; block height == full batch dim (always legal)
    per_row = 2 * (in_dim * x_itemsize + out_dim * out_itemsize)  # 2x = double buffering
    bb = _TILE_VMEM_BUDGET // per_row                             # VMEM-budget-driven
    bb = min(bb, _MAX_BLOCK_BATCH)
    # >= 2 grid steps whenever batch allows, so the "parallel" axis can shard across both
    # v7x TensorCores (costs at most one extra ~0.35us step on single-TC v5e/v6e).
    bb = min(bb, _round_up(pl.cdiv(batch, 2), 8))
    return int(max(8, (bb // 8) * 8))  # sublane rule: multiple of 8


@functools.partial(jax.jit, static_argnames=("block_batch",))
def simple_probe_forward(x, params, *, block_batch=None):
    """x: (batch, in_dim). params: dict of w1,b1,w2,b2,w3,b3 (W stored (in, out))."""
    w1, b1, w2, b2, w3, b3 = (params[k] for k in ("w1", "b1", "w2", "b2", "w3", "b3"))
    batch, in_dim = x.shape
    hidden = w1.shape[1]
    out_dim = w3.shape[1]
    out_dtype = x.dtype

    x_itemsize = jnp.dtype(x.dtype).itemsize
    out_itemsize = jnp.dtype(out_dtype).itemsize
    if block_batch is None:
        block_batch = _pick_block_batch(batch, in_dim, out_dim, x_itemsize, out_itemsize)

    # Ragged last block instead of materializing a padded copy of x in HBM:
    # OOB rows of the last x block read padding, OOB output rows are dropped.
    grid = (pl.cdiv(batch, block_batch),)

    x_spec = pl.BlockSpec((block_batch, in_dim), lambda i: (i, 0))
    res = lambda a: pl.BlockSpec(a.shape, lambda i: (0, 0))  # weights resident across tiles
    out_spec = pl.BlockSpec((block_batch, out_dim), lambda i: (i, 0))

    # Advisory cost estimate so XLA schedules the custom call sensibly inside larger jits.
    operands = (x, w1, b1, w2, b2, w3, b3)
    flops = 2 * batch * (in_dim * hidden + hidden * hidden + hidden * out_dim)
    bytes_accessed = int(
        sum(a.size * jnp.dtype(a.dtype).itemsize for a in operands)
        + batch * out_dim * out_itemsize)
    cost = pl.CostEstimate(flops=int(flops), transcendentals=0,
                           bytes_accessed=bytes_accessed)

    return pl.pallas_call(
        _mlp_probe_kernel,
        out_shape=jax.ShapeDtypeStruct((batch, out_dim), out_dtype),
        grid=grid,
        in_specs=[x_spec, res(w1), res(b1), res(w2), res(b2), res(w3), res(b3)],
        out_specs=out_spec,
        compiler_params=pltpu.CompilerParams(
            dimension_semantics=("parallel",),
            # 32 MiB: v6e/v7x scoped default, raises v5e's 16 MiB default, safely under
            # v7x's 64 MiB physical VMEM.  The tile budget above is sized to fit it.
            vmem_limit_bytes=32 * 1024 * 1024,
        ),
        cost_estimate=cost,
    )(x, w1, b1, w2, b2, w3, b3)


def init_params(key, in_dim, out_dim=2, hidden=HIDDEN, dtype=jnp.float32):
    """PyTorch-Linear-like uniform init.  Weights stored (in_features, out_features) so
    the kernel computes y = x @ W + b (== x @ W_pt.T + b).  dtype=jnp.bfloat16 halves
    weight (and, with bf16 x, activation) HBM traffic on v5e/v6e/v7x alike; biases stay
    f32 because bias add / ReLU are done in f32."""
    ks = jax.random.split(key, 6)

    def lin(kw, kb, fan_in, fan_out):
        bound = 1.0 / jnp.sqrt(fan_in)
        w = jax.random.uniform(kw, (fan_in, fan_out), jnp.float32, -bound, bound)
        b = jax.random.uniform(kb, (1, fan_out), jnp.float32, -bound, bound)
        return w.astype(dtype), b  # bias kept f32

    w1, b1 = lin(ks[0], ks[1], in_dim, hidden)
    w2, b2 = lin(ks[2], ks[3], hidden, hidden)
    w3, b3 = lin(ks[4], ks[5], hidden, out_dim)
    return {"w1": w1, "b1": b1, "w2": w2, "b2": b2, "w3": w3, "b3": b3}


def _reference(x, p):
    # Mirrors the kernel's dtype policy: cast to weight dtype before each dot, f32 accum.
    f32 = jnp.float32
    h = jnp.dot(x.astype(p["w1"].dtype), p["w1"], preferred_element_type=f32) + p["b1"]
    h = jnp.maximum(h, 0.0)
    h = jnp.dot(h.astype(p["w2"].dtype), p["w2"], preferred_element_type=f32) + p["b2"]
    h = jnp.maximum(h, 0.0)
    return jnp.dot(h.astype(p["w3"].dtype), p["w3"], preferred_element_type=f32) + p["b3"]


if __name__ == "__main__":
    key = jax.random.PRNGKey(0)
    k_x, k_p = jax.random.split(key)

    batch, in_dim, out_dim = 8, 32, 2
    x = jax.random.normal(k_x, (batch, in_dim), jnp.float32)

    # f32 path: tight tolerance check.
    params = init_params(k_p, in_dim, out_dim, dtype=jnp.float32)
    y = jax.block_until_ready(simple_probe_forward(x, params))
    y_ref = _reference(x, params)
    assert y.shape == (batch, out_dim)
    assert jnp.allclose(y, y_ref, atol=1e-5, rtol=1e-5)

    # bf16 path (halved x / weight HBM traffic on every generation): loose tolerance.
    params_bf16 = init_params(k_p, in_dim, out_dim, dtype=jnp.bfloat16)
    x_bf16 = x.astype(jnp.bfloat16)
    y16 = jax.block_until_ready(simple_probe_forward(x_bf16, params_bf16))
    y16_ref = _reference(x_bf16, params_bf16)
    assert y16.shape == (batch, out_dim)
    assert jnp.allclose(y16.astype(jnp.float32), y16_ref.astype(jnp.float32),
                        atol=5e-2, rtol=5e-2)

    print("KERNEL_OK")
</pallas_src>

<mosaic_0001>
module attributes {stable_mosaic.version = 11 : i64} {
  func.func @_mlp_probe_kernel(%arg0: i32, %arg1: memref<8x32xf32, #tpu.memory_space<vmem>>, %arg2: memref<32x128xf32, #tpu.memory_space<vmem>>, %arg3: memref<1x128xf32, #tpu.memory_space<vmem>>, %arg4: memref<128x128xf32, #tpu.memory_space<vmem>>, %arg5: memref<1x128xf32, #tpu.memory_space<vmem>>, %arg6: memref<128x2xf32, #tpu.memory_space<vmem>>, %arg7: memref<1x2xf32, #tpu.memory_space<vmem>>, %arg8: memref<8x2xf32, #tpu.memory_space<vmem>>) attributes {dimension_semantics = [#tpu.dimension_semantics<parallel>], iteration_bounds = array<i64: 1>, scalar_prefetch = 0 : i64, scratch_operands = 0 : i64, tpu.core_type = #tpu.core_type<tc>, window_params = [{transform_indices = @transform_0, window_bounds = array<i64: 8, 32>}, {pipeline_mode = #tpu.pipeline_mode<synchronous>, transform_indices = @transform_1, window_bounds = array<i64: 32, 128>}, {pipeline_mode = #tpu.pipeline_mode<synchronous>, transform_indices = @transform_2, window_bounds = array<i64: 1, 128>}, {pipeline_mode = #tpu.pipeline_mode<synchronous>, transform_indices = @transform_3, window_bounds = array<i64: 128, 128>}, {pipeline_mode = #tpu.pipeline_mode<synchronous>, transform_indices = @transform_4, window_bounds = array<i64: 1, 128>}, {pipeline_mode = #tpu.pipeline_mode<synchronous>, transform_indices = @transform_5, window_bounds = array<i64: 128, 2>}, {pipeline_mode = #tpu.pipeline_mode<synchronous>, transform_indices = @transform_6, window_bounds = array<i64: 1, 2>}, {transform_indices = @transform_7, window_bounds = array<i64: 8, 2>}]} {
    %c0 = arith.constant 0 : index
    %c0_0 = arith.constant 0 : index
    %0 = vector.load %arg1[%c0, %c0_0] : memref<8x32xf32, #tpu.memory_space<vmem>>, vector<8x32xf32>
    %c0_1 = arith.constant 0 : index
    %c0_2 = arith.constant 0 : index
    %1 = vector.load %arg2[%c0_1, %c0_2] : memref<32x128xf32, #tpu.memory_space<vmem>>, vector<32x128xf32>
    %cst = arith.constant dense<0.000000e+00> : vector<8x128xf32>
    %2 = tpu.matmul %0, %1, %cst {dimension_numbers = #tpu.dot_dimension_numbers<[1], [0], [0], [1], [0, 0, 1, 1], [], []>} : vector<8x32xf32>, vector<32x128xf32>, vector<8x128xf32> -> vector<8x128xf32>
    %c0_3 = arith.constant 0 : index
    %c0_4 = arith.constant 0 : index
    %3 = vector.load %arg3[%c0_3, %c0_4] : memref<1x128xf32, #tpu.memory_space<vmem>>, vector<1x128xf32>
    %4 = vector.broadcast %3 : vector<1x128xf32> to vector<8x128xf32>
    %5 = arith.addf %2, %4 : vector<8x128xf32>
    %cst_5 = arith.constant 0.000000e+00 : f32
    %6 = vector.broadcast %cst_5 : f32 to vector<8x128xf32>
    %7 = arith.maximumf %5, %6 : vector<8x128xf32>
    %c0_6 = arith.constant 0 : index
    %c0_7 = arith.constant 0 : index
    %8 = vector.load %arg4[%c0_6, %c0_7] : memref<128x128xf32, #tpu.memory_space<vmem>>, vector<128x128xf32>
    %cst_8 = arith.constant dense<0.000000e+00> : vector<8x128xf32>
    %9 = tpu.matmul %7, %8, %cst_8 {dimension_numbers = #tpu.dot_dimension_numbers<[1], [0], [0], [1], [0, 0, 1, 1], [], []>} : vector<8x128xf32>, vector<128x128xf32>, vector<8x128xf32> -> vector<8x128xf32>
    %c0_9 = arith.constant 0 : index
    %c0_10 = arith.constant 0 : index
    %10 = vector.load %arg5[%c0_9, %c0_10] : memref<1x128xf32, #tpu.memory_space<vmem>>, vector<1x128xf32>
    %11 = vector.broadcast %10 : vector<1x128xf32> to vector<8x128xf32>
    %12 = arith.addf %9, %11 : vector<8x128xf32>
    %cst_11 = arith.constant 0.000000e+00 : f32
    %13 = vector.broadcast %cst_11 : f32 to vector<8x128xf32>
    %14 = arith.maximumf %12, %13 : vector<8x128xf32>
    %c0_12 = arith.constant 0 : index
    %c0_13 = arith.constant 0 : index
    %15 = vector.load %arg6[%c0_12, %c0_13] : memref<128x2xf32, #tpu.memory_space<vmem>>, vector<128x2xf32>
    %cst_14 = arith.constant dense<0.000000e+00> : vector<8x2xf32>
    %16 = tpu.matmul %14, %15, %cst_14 {dimension_numbers = #tpu.dot_dimension_numbers<[1], [0], [0], [1], [0, 0, 1, 1], [], []>} : vector<8x128xf32>, vector<128x2xf32>, vector<8x2xf32> -> vector<8x2xf32>
    %c0_15 = arith.constant 0 : index
    %c0_16 = arith.constant 0 : index
    %17 = vector.load %arg7[%c0_15, %c0_16] : memref<1x2xf32, #tpu.memory_space<vmem>>, vector<1x2xf32>
    %18 = vector.broadcast %17 : vector<1x2xf32> to vector<8x2xf32>
    %19 = arith.addf %16, %18 : vector<8x2xf32>
    %c0_17 = arith.constant 0 : index
    %c0_18 = arith.constant 0 : index
    %20 = vector.load %arg8[%c0_17, %c0_18] : memref<8x2xf32, #tpu.memory_space<vmem>>, vector<8x2xf32>
    tpu.vector_store %arg8[%c0_17, %c0_18], %19 {strides = array<i32>} : memref<8x2xf32, #tpu.memory_space<vmem>>, vector<8x2xf32>,
    return
  }
  func.func @transform_0(%arg0: i32) -> (i32, i32) {
    %c0_i32 = arith.constant 0 : i32
    %c0_i32_0 = arith.constant 0 : i32
    return %arg0, %c0_i32 : i32, i32
  }
  func.func @transform_1(%arg0: i32) -> (i32, i32) {
    %c0_i32 = arith.constant 0 : i32
    %c0_i32_0 = arith.constant 0 : i32
    %c0_i32_1 = arith.constant 0 : i32
    return %c0_i32, %c0_i32_0 : i32, i32
  }
  func.func @transform_2(%arg0: i32) -> (i32, i32) {
    %c0_i32 = arith.constant 0 : i32
    %c0_i32_0 = arith.constant 0 : i32
    %c0_i32_1 = arith.constant 0 : i32
    return %c0_i32, %c0_i32_0 : i32, i32
  }
  func.func @transform_3(%arg0: i32) -> (i32, i32) {
    %c0_i32 = arith.constant 0 : i32
    %c0_i32_0 = arith.constant 0 : i32
    %c0_i32_1 = arith.constant 0 : i32
    return %c0_i32, %c0_i32_0 : i32, i32
  }
  func.func @transform_4(%arg0: i32) -> (i32, i32) {
    %c0_i32 = arith.constant 0 : i32
    %c0_i32_0 = arith.constant 0 : i32
    %c0_i32_1 = arith.constant 0 : i32
    return %c0_i32, %c0_i32_0 : i32, i32
  }
  func.func @transform_5(%arg0: i32) -> (i32, i32) {
    %c0_i32 = arith.constant 0 : i32
    %c0_i32_0 = arith.constant 0 : i32
    %c0_i32_1 = arith.constant 0 : i32
    return %c0_i32, %c0_i32_0 : i32, i32
  }
  func.func @transform_6(%arg0: i32) -> (i32, i32) {
    %c0_i32 = arith.constant 0 : i32
    %c0_i32_0 = arith.constant 0 : i32
    %c0_i32_1 = arith.constant 0 : i32
    return %c0_i32, %c0_i32_0 : i32, i32
  }
  func.func @transform_7(%arg0: i32) -> (i32, i32) {
    %c0_i32 = arith.constant 0 : i32
    %c0_i32_0 = arith.constant 0 : i32
    return %arg0, %c0_i32 : i32, i32
  }
}

</mosaic_0001>

<llo_original>
// kernel: simple_probe_forward.1
$region0: #{simple_probe_forward.1}
  #allocation0 [shape = 'u32[]', space=smem, size = 0x4, offset = 0x4, fixed_abs, tag = 'smem constant byte address 0x4 - core index']
  #allocation1 [shape = 'u32[144,128]{1,0:T(1,128)}', space=vmem, size = 0x12000, scoped, tag = 'internal scratch']
  %s0 = inlined_call_operand.vmem [shape: f32[8,32], index: 0, kind: input, shape index: {}]
  %s1 = inlined_call_operand.hbm [shape: f32[32,128], index: 1, kind: input, shape index: {}]
  %s2 = inlined_call_operand.vmem [shape: f32[1,128], index: 2, kind: input, shape index: {}]
  %s3 = inlined_call_operand.vmem [shape: f32[128,128], index: 3, kind: input, shape index: {}]
  %s4 = inlined_call_operand.vmem [shape: f32[1,128], index: 4, kind: input, shape index: {}]
  %s5 = inlined_call_operand.vmem [shape: f32[128,2], index: 5, kind: input, shape index: {}]
  %s6 = inlined_call_operand.vmem [shape: f32[1,2], index: 6, kind: input, shape index: {}]
  %s7 = inlined_call_operand.vmem [shape: f32[8,2], index: 7, kind: output, shape index: {}]
  %s8 = sld [smem:[#allocation0]]
  $region42: #{simple_probe_forward.1} parent=0
    _
  %s10 = ssub.s32 1, %s8
  %s11 = scalar_select 0, %s10, %s8
  $region1: #{simple_probe_forward.1} parent=0
    #allocation2 [shape = 'u8[16384]{0}', space=vmem, size = 0x4000, scoped, tag = 'input window, operand 1, single buffered']
    #allocation3 [shape = 's32[1]{0}', space=sflag, size = 0x4, scoped, tag = 'scoped memory for simple_probe_forward.1']
    %12 = vsyncpa [#allocation3], 0
    // Predicated region
    $region2: #{simple_probe_forward.1} parent=1 // pred_check
      _
    $region3: #{simple_probe_forward.1} parent=1 // pred_check_branch
      %14 = sbr.rel (0) target = $region5
    $region4: #{simple_probe_forward.1} parent=1 // pred_region
      _
    $region5: #{simple_probe_forward.1} parent=1 // pred_fallthru
      _
    // Predicated region
    $region6: #{simple_probe_forward.1} parent=1 // pred_check
      _
    $region7: #{simple_probe_forward.1} parent=1 // pred_check_branch
      %16 = sbr.rel (0) target = $region9
    $region8: #{simple_probe_forward.1} parent=1 // pred_region
      %s18 = ssub.s32 512, 512
      %19 = vsyncadd [#allocation3], %s18
      %s20 = sshll.u32 [#allocation2], 4
      %s21 = int_to_ptr.vmem [resolvable:$true] %s20
      %26 = dma.hbm_to_vmem [thread:$0]  %s1, 512, %s21, [#allocation3], 128, 128, 8
    $region9: #{simple_probe_forward.1} parent=1 // pred_fallthru
      _
    // Predicated region
    $region10: #{simple_probe_forward.1} parent=1 // pred_check
      _
    $region11: #{simple_probe_forward.1} parent=1 // pred_check_branch
      %28 = sbr.rel (0) target = $region13
    $region12: #{simple_probe_forward.1} parent=1 // pred_region
      _
    $region13: #{simple_probe_forward.1} parent=1 // pred_fallthru
      _
    // Predicated region
    $region14: #{simple_probe_forward.1} parent=1 // pred_check
      _
    $region15: #{simple_probe_forward.1} parent=1 // pred_check_branch
      %30 = sbr.rel (0) target = $region17
    $region16: #{simple_probe_forward.1} parent=1 // pred_region
      _
    $region17: #{simple_probe_forward.1} parent=1 // pred_fallthru
      _
    // Predicated region
    $region18: #{simple_probe_forward.1} parent=1 // pred_check
      _
    $region19: #{simple_probe_forward.1} parent=1 // pred_check_branch
      %32 = sbr.rel (0) target = $region21
    $region20: #{simple_probe_forward.1} parent=1 // pred_region
      _
    $region21: #{simple_probe_forward.1} parent=1 // pred_fallthru
      _
    // Predicated region
    $region22: #{simple_probe_forward.1} parent=1 // pred_check
      _
    $region23: #{simple_probe_forward.1} parent=1 // pred_check_branch
      %34 = sbr.rel (0) target = $region25
    $region24: #{simple_probe_forward.1} parent=1 // pred_region
      _
    $region25: #{simple_probe_forward.1} parent=1 // pred_fallthru
      _
    // Predicated region
    $region26: #{simple_probe_forward.1} parent=1 // pred_check
      _
    $region27: #{simple_probe_forward.1} parent=1 // pred_check_branch
      %36 = sbr.rel (0) target = $region29
    $region28: #{simple_probe_forward.1} parent=1 // pred_region
      _
    $region29: #{simple_probe_forward.1} parent=1 // pred_fallthru
      _
    // Predicated region
    $region30: #{simple_probe_forward.1} parent=1 // pred_check
      _
    $region31: #{simple_probe_forward.1} parent=1 // pred_check_branch
      %38 = sbr.rel (0) target = $region33
    $region32: #{simple_probe_forward.1} parent=1 // pred_region
      %39 = dma.done [#allocation3], 512
    $region33: #{simple_probe_forward.1} parent=1 // pred_fallthru
      _
    %v40 = vld [vmem:[%s0] sm:$0xff]
    %v41 = vld [vmem:[#allocation2] sm:$0xff]
    %v42 = vld [vmem:[#allocation2 + $0x8] sm:$0xff]
    %v43 = vld [vmem:[#allocation2 + $0x10] sm:$0xff]
    %v44 = vld [vmem:[#allocation2 + $0x18] sm:$0xff]
    %v45 = vld [vmem:[%s2] sm:$0x1]
    %v47 = vlaneseq
    %v48 = vshrl.u32 %v47, 7
    %v49 = vsub.s32 0, %v48
    %v50 = vrot.slane %v45, %v49
    %vm52 = vcmask 261120
    %v54 = vsel %vm52, %v40, 0
    %56 = vmatprep.subr.mxu0 0.0
    %57 = vmatpush1.msra.mxu0 %v41
    %58 = vmatprep.subr.mxu0 0.0
    %59 = vmatpush1.msra.mxu0 %v42
    %60 = vmatprep.subr.mxu0 0.0
    %61 = vmatpush1.msra.mxu0 %v43
    %62 = vmatprep.subr.mxu0 0.0
    %63 = vmatpush1.msra.mxu0 %v44
    %64 = vmatprep.subr.mxu0 0.0
    %65 = vmatpush1.msra.mxu0 0.0
    %66 = vmatprep.subr.mxu0 0.0
    %67 = vmatpush1.msra.mxu0 0.0
    %68 = vmatprep.subr.mxu0 0.0
    %69 = vmatpush1.msra.mxu0 0.0
    %70 = vmatprep.subr.mxu0 0.0
    %71 = vmatpush1.msra.mxu0 0.0
    %72 = vmatprep.subr.mxu0 0.0
    %73 = vmatpush1.msra.mxu0 0.0
    %74 = vmatprep.subr.mxu0 0.0
    %75 = vmatpush1.msra.mxu0 0.0
    %76 = vmatprep.subr.mxu0 0.0
    %77 = vmatpush1.msra.mxu0 0.0
    %78 = vmatprep.subr.mxu0 0.0
    %79 = vmatpush1.msra.mxu0 0.0
    %80 = vmatprep.subr.mxu0 0.0
    %81 = vmatpush1.msra.mxu0 0.0
    %82 = vmatprep.subr.mxu0 0.0
    %83 = vmatpush1.msra.mxu0 0.0
    %84 = vmatprep.subr.mxu0 0.0
    %85 = vmatpush1.msra.mxu0 0.0
    %86 = vmatprep.subr.mxu0 0.0
    %87 = vmatpush1.msra.mxu0 0.0
    %88 = vmatprep.subr.mxu0 0.0
    %89 = vmatpush1.msra.mxu0 0.0
    %90 = vmatprep.subr.mxu0 0.0
    %91 = vmatpush1.msra.mxu0 0.0
    %92 = vmatprep.subr.mxu0 0.0
    %93 = vmatpush1.msra.mxu0 0.0
    %94 = vmatprep.subr.mxu0 0.0
    %95 = vmatpush1.msra.mxu0 0.0
    %96 = vmatprep.subr.mxu0 0.0
    %97 = vmatpush1.msra.mxu0 0.0
    %98 = vmatprep.subr.mxu0 0.0
    %99 = vmatpush1.msra.mxu0 0.0
    %100 = vmatprep.subr.mxu0 0.0
    %101 = vmatpush1.msra.mxu0 0.0
    %102 = vmatprep.subr.mxu0 0.0
    %103 = vmatpush1.msra.mxu0 0.0
    %104 = vmatprep.subr.mxu0 0.0
    %105 = vmatpush1.msra.mxu0 0.0
    %106 = vmatprep.subr.mxu0 0.0
    %107 = vmatpush1.msra.mxu0 0.0
    %108 = vmatprep.subr.mxu0 0.0
    %109 = vmatpush1.msra.mxu0 0.0
    %110 = vmatprep.subr.mxu0 0.0
    %111 = vmatpush1.msra.mxu0 0.0
    %112 = vmatprep.subr.mxu0 0.0
    %113 = vmatpush1.msra.mxu0 0.0
    %114 = vmatprep.subr.mxu0 0.0
    %115 = vmatpush1.msra.mxu0 0.0
    %116 = vmatprep.subr.mxu0 0.0
    %117 = vmatpush1.msra.mxu0 0.0
    %118 = vmatprep.subr.mxu0 0.0
    %119 = vmatpush1.msra.mxu0 0.0
    %120 = vmatprep.mubr.f32.mxu0 0.0
    %121 = vmatmul.mubr.f32.gmra.mrb[0].mxu0 %v54
    %v122 = vpop.f32.mrb[0].mxu0
    %v123 = vadd.f32 %v50, %v122
    %v124 = vpop.f32.mrb[0].mxu0
    %125 = vdwg.mxu0
    %v126 = vmax.f32 %v123, 0.0
    %v127 = vld [vmem:[%s3] sm:$0xff]
    %v128 = vld [vmem:[%s3 + $0x8] sm:$0xff]
    %v129 = vld [vmem:[%s3 + $0x10] sm:$0xff]
    %v130 = vld [vmem:[%s3 + $0x18] sm:$0xff]
    %v131 = vld [vmem:[%s3 + $0x20] sm:$0xff]
    %v132 = vld [vmem:[%s3 + $0x28] sm:$0xff]
    %v133 = vld [vmem:[%s3 + $0x30] sm:$0xff]
    %v134 = vld [vmem:[%s3 + $0x38] sm:$0xff]
    %v135 = vld [vmem:[%s3 + $0x40] sm:$0xff]
    %v136 = vld [vmem:[%s3 + $0x48] sm:$0xff]
    %v137 = vld [vmem:[%s3 + $0x50] sm:$0xff]
    %v138 = vld [vmem:[%s3 + $0x58] sm:$0xff]
    %v139 = vld [vmem:[%s3 + $0x60] sm:$0xff]
    %v140 = vld [vmem:[%s3 + $0x68] sm:$0xff]
    %v141 = vld [vmem:[%s3 + $0x70] sm:$0xff]
    %v142 = vld [vmem:[%s3 + $0x78] sm:$0xff]
    %v143 = vld [vmem:[%s4] sm:$0x1]
    %v145 = vlaneseq
    %v146 = vshrl.u32 %v145, 7
    %v147 = vsub.s32 0, %v146
    %v148 = vrot.slane %v143, %v147
    %150 = vmatprep.subr.mxu0 0.0
    %151 = vmatpush1.msra.mxu0 %v127
    %152 = vmatprep.subr.mxu0 0.0
    %153 = vmatpush1.msra.mxu0 %v128
    %154 = vmatprep.subr.mxu0 0.0
    %155 = vmatpush1.msra.mxu0 %v129
    %156 = vmatprep.subr.mxu0 0.0
    %157 = vmatpush1.msra.mxu0 %v130
    %158 = vmatprep.subr.mxu0 0.0
    %159 = vmatpush1.msra.mxu0 %v131
    %160 = vmatprep.subr.mxu0 0.0
    %161 = vmatpush1.msra.mxu0 %v132
    %162 = vmatprep.subr.mxu0 0.0
    %163 = vmatpush1.msra.mxu0 %v133
    %164 = vmatprep.subr.mxu0 0.0
    %165 = vmatpush1.msra.mxu0 %v134
    %166 = vmatprep.subr.mxu0 0.0
    %167 = vmatpush1.msra.mxu0 %v135
    %168 = vmatprep.subr.mxu0 0.0
    %169 = vmatpush1.msra.mxu0 %v136
    %170 = vmatprep.subr.mxu0 0.0
    %171 = vmatpush1.msra.mxu0 %v137
    %172 = vmatprep.subr.mxu0 0.0
    %173 = vmatpush1.msra.mxu0 %v138
    %174 = vmatprep.subr.mxu0 0.0
    %175 = vmatpush1.msra.mxu0 %v139
    %176 = vmatprep.subr.mxu0 0.0
    %177 = vmatpush1.msra.mxu0 %v140
    %178 = vmatprep.subr.mxu0 0.0
    %179 = vmatpush1.msra.mxu0 %v141
    %180 = vmatprep.subr.mxu0 0.0
    %181 = vmatpush1.msra.mxu0 %v142
    %182 = vmatprep.subr.mxu0 0.0
    %183 = vmatpush1.msra.mxu0 0.0
    %184 = vmatprep.subr.mxu0 0.0
    %185 = vmatpush1.msra.mxu0 0.0
    %186 = vmatprep.subr.mxu0 0.0
    %187 = vmatpush1.msra.mxu0 0.0
    %188 = vmatprep.subr.mxu0 0.0
    %189 = vmatpush1.msra.mxu0 0.0
    %190 = vmatprep.subr.mxu0 0.0
    %191 = vmatpush1.msra.mxu0 0.0
    %192 = vmatprep.subr.mxu0 0.0
    %193 = vmatpush1.msra.mxu0 0.0
    %194 = vmatprep.subr.mxu0 0.0
    %195 = vmatpush1.msra.mxu0 0.0
    %196 = vmatprep.subr.mxu0 0.0
    %197 = vmatpush1.msra.mxu0 0.0
    %198 = vmatprep.subr.mxu0 0.0
    %199 = vmatpush1.msra.mxu0 0.0
    %200 = vmatprep.subr.mxu0 0.0
    %201 = vmatpush1.msra.mxu0 0.0
    %202 = vmatprep.subr.mxu0 0.0
    %203 = vmatpush1.msra.mxu0 0.0
    %204 = vmatprep.subr.mxu0 0.0
    %205 = vmatpush1.msra.mxu0 0.0
    %206 = vmatprep.subr.mxu0 0.0
    %207 = vmatpush1.msra.mxu0 0.0
    %208 = vmatprep.subr.mxu0 0.0
    %209 = vmatpush1.msra.mxu0 0.0
    %210 = vmatprep.subr.mxu0 0.0
    %211 = vmatpush1.msra.mxu0 0.0
    %212 = vmatprep.subr.mxu0 0.0
    %213 = vmatpush1.msra.mxu0 0.0
    %214 = vmatprep.mubr.f32.mxu0 0.0
    %215 = vmatmul.mubr.f32.gmra.mrb[0].mxu0 %v126
    %v216 = vpop.f32.mrb[0].mxu0
    %v217 = vadd.f32 %v148, %v216
    %v218 = vpop.f32.mrb[0].mxu0
    %219 = vdwg.mxu0
    %v220 = vmax.f32 %v217, 0.0
    %v221 = vld [vmem:[%s5] sm:$0xff]
    %v222 = vld [vmem:[%s5 + $0x8] sm:$0xff]
    %v223 = vld [vmem:[%s5 + $0x10] sm:$0xff]
    %v224 = vld [vmem:[%s5 + $0x18] sm:$0xff]
    %v225 = vld [vmem:[%s5 + $0x20] sm:$0xff]
    %v226 = vld [vmem:[%s5 + $0x28] sm:$0xff]
    %v227 = vld [vmem:[%s5 + $0x30] sm:$0xff]
    %v228 = vld [vmem:[%s5 + $0x38] sm:$0xff]
    %v229 = vld [vmem:[%s5 + $0x40] sm:$0xff]
    %v230 = vld [vmem:[%s5 + $0x48] sm:$0xff]
    %v231 = vld [vmem:[%s5 + $0x50] sm:$0xff]
    %v232 = vld [vmem:[%s5 + $0x58] sm:$0xff]
    %v233 = vld [vmem:[%s5 + $0x60] sm:$0xff]
    %v234 = vld [vmem:[%s5 + $0x68] sm:$0xff]
    %v235 = vld [vmem:[%s5 + $0x70] sm:$0xff]
    %v236 = vld [vmem:[%s5 + $0x78] sm:$0xff]
    %v237 = vld [vmem:[%s6] sm:$0x1]
    %v239 = vlaneseq
    %v240 = vshrl.u32 %v239, 7
    %v241 = vsub.s32 0, %v240
    %v242 = vrot.slane %v237, %v241
    %244 = vmatprep.subr.mxu0 0.0
    %245 = vmatpush1.msra.mxu0 %v221
    %246 = vmatprep.subr.mxu0 0.0
    %247 = vmatpush1.msra.mxu0 %v222
    %248 = vmatprep.subr.mxu0 0.0
    %249 = vmatpush1.msra.mxu0 %v223
    %250 = vmatprep.subr.mxu0 0.0
    %251 = vmatpush1.msra.mxu0 %v224
    %252 = vmatprep.subr.mxu0 0.0
    %253 = vmatpush1.msra.mxu0 %v225
    %254 = vmatprep.subr.mxu0 0.0
    %255 = vmatpush1.msra.mxu0 %v226
    %256 = vmatprep.subr.mxu0 0.0
    %257 = vmatpush1.msra.mxu0 %v227
    %258 = vmatprep.subr.mxu0 0.0
    %259 = vmatpush1.msra.mxu0 %v228
    %260 = vmatprep.subr.mxu0 0.0
    %261 = vmatpush1.msra.mxu0 %v229
    %262 = vmatprep.subr.mxu0 0.0
    %263 = vmatpush1.msra.mxu0 %v230
    %264 = vmatprep.subr.mxu0 0.0
    %265 = vmatpush1.msra.mxu0 %v231
    %266 = vmatprep.subr.mxu0 0.0
    %267 = vmatpush1.msra.mxu0 %v232
    %268 = vmatprep.subr.mxu0 0.0
    %269 = vmatpush1.msra.mxu0 %v233
    %270 = vmatprep.subr.mxu0 0.0
    %271 = vmatpush1.msra.mxu0 %v234
    %272 = vmatprep.subr.mxu0 0.0
    %273 = vmatpush1.msra.mxu0 %v235
    %274 = vmatprep.subr.mxu0 0.0
    %275 = vmatpush1.msra.mxu0 %v236
    %276 = vmatprep.subr.mxu0 0.0
    %277 = vmatpush1.msra.mxu0 0.0
    %278 = vmatprep.subr.mxu0 0.0
    %279 = vmatpush1.msra.mxu0 0.0
    %280 = vmatprep.subr.mxu0 0.0
    %281 = vmatpush1.msra.mxu0 0.0
    %282 = vmatprep.subr.mxu0 0.0
    %283 = vmatpush1.msra.mxu0 0.0
    %284 = vmatprep.subr.mxu0 0.0
    %285 = vmatpush1.msra.mxu0 0.0
    %286 = vmatprep.subr.mxu0 0.0
    %287 = vmatpush1.msra.mxu0 0.0
    %288 = vmatprep.subr.mxu0 0.0
    %289 = vmatpush1.msra.mxu0 0.0
    %290 = vmatprep.subr.mxu0 0.0
    %291 = vmatpush1.msra.mxu0 0.0
    %292 = vmatprep.subr.mxu0 0.0
    %293 = vmatpush1.msra.mxu0 0.0
    %294 = vmatprep.subr.mxu0 0.0
    %295 = vmatpush1.msra.mxu0 0.0
    %296 = vmatprep.subr.mxu0 0.0
    %297 = vmatpush1.msra.mxu0 0.0
    %298 = vmatprep.subr.mxu0 0.0
    %299 = vmatpush1.msra.mxu0 0.0
    %300 = vmatprep.subr.mxu0 0.0
    %301 = vmatpush1.msra.mxu0 0.0
    %302 = vmatprep.subr.mxu0 0.0
    %303 = vmatpush1.msra.mxu0 0.0
    %304 = vmatprep.subr.mxu0 0.0
    %305 = vmatpush1.msra.mxu0 0.0
    %306 = vmatprep.subr.mxu0 0.0
    %307 = vmatpush1.msra.mxu0 0.0
    %308 = vmatprep.mubr.f32.mxu0 0.0
    %309 = vmatmul.mubr.f32.gmra.mrb[0].mxu0 %v220
    %v310 = vpop.f32.mrb[0].mxu0
    %v311 = vadd.f32 %v242, %v310
    %v312 = vpop.f32.mrb[0].mxu0
    %313 = vdwg.mxu0
    %vm314 = vcmask 15360
    %315 = vst.msk [vmem:[%s7] sm:$0xff] %vm314, %v311
    // Predicated region
    $region34: #{simple_probe_forward.1} parent=1 // pred_check
      _
    $region35: #{simple_probe_forward.1} parent=1 // pred_check_branch
      %317 = sbr.rel (0) target = $region37
    $region36: #{simple_probe_forward.1} parent=1 // pred_region
      _
    $region37: #{simple_probe_forward.1} parent=1 // pred_fallthru
      _
    // Predicated region
    $region38: #{simple_probe_forward.1} parent=1 // pred_check
      _
    $region39: #{simple_probe_forward.1} parent=1 // pred_check_branch
      %319 = sbr.rel (0) target = $region41
    $region40: #{simple_probe_forward.1} parent=1 // pred_region
      _
    $region41: #{simple_probe_forward.1} parent=1 // pred_fallthru
      _
    %320 = vsyncpa [#allocation3], 1

</llo_original>
